<compile_context>
chip_gen: v6e
topology: v6e:2x2x1
jax: 0.10.0
libtpu: 0.0.40
codegen_flags: <defaults>
</compile_context>

<pallas_src>
import jax
import jax.numpy as jnp
from jax.experimental import pallas as pl
from jax.experimental.pallas import tpu as pltpu


def _addmm_kernel_acc(bias_ref, m1_ref, m2_ref, o_ref, acc_ref):
    """General path: K is split across grid axis 2; accumulate in f32 VMEM."""
    k = pl.program_id(2)

    @pl.when(k == 0)
    def _init():
        acc_ref[...] = jnp.zeros_like(acc_ref)

    acc_ref[...] += jnp.dot(
        m1_ref[...], m2_ref[...], preferred_element_type=jnp.float32
    )

    @pl.when(k == pl.num_programs(2) - 1)
    def _finalize():
        o_ref[...] = (acc_ref[...] + bias_ref[...].astype(jnp.float32)).astype(
            o_ref.dtype
        )


def _addmm_kernel_single_k(bias_ref, m1_ref, m2_ref, o_ref):
    """Fast path: whole K in one block -> no scratch accumulator needed."""
    acc = jnp.dot(m1_ref[...], m2_ref[...], preferred_element_type=jnp.float32)
    o_ref[...] = (acc + bias_ref[...].astype(jnp.float32)).astype(o_ref.dtype)


def _pick_tile(dim, max_tile, align):
    """Largest multiple-of-`align` tile <= max_tile that evenly divides `dim`;
    otherwise fall back to the full extent (full-dim blocks are always legal)."""
    t = min(max_tile, dim)
    t = (t // align) * align
    while t >= align:
        if dim % t == 0:
            return t
        t -= align
    return dim


def addmm(inp, m1, m2, *, max_tm=256, max_tn=512, max_tk=512):
    M, K = m1.shape
    K2, N = m2.shape
    assert K == K2, f"inner dims mismatch: {K} vs {K2}"

    out_dtype = jnp.result_type(inp.dtype, m1.dtype, m2.dtype)

    def _sub_align(dt):
        # sublane packing: f32 -> 8, bf16 -> 16, int8/fp8 -> 32
        return max(8, 32 // jnp.dtype(dt).itemsize)

    tm = _pick_tile(M, max_tm, _sub_align(m1.dtype))
    tn = _pick_tile(N, max_tn, 128)
    tk = _pick_tile(K, max_tk, 128)

    # Bias at its native broadcastable shape (no HBM materialization of (M, N)).
    bias2d = inp
    if bias2d.ndim == 0:
        bias2d = bias2d.reshape(1, 1)
    elif bias2d.ndim == 1:
        bias2d = bias2d.reshape(1, bias2d.shape[0])
    bm, bn = bias2d.shape
    assert bm in (1, M) and bn in (1, N), (
        f"bias shape {inp.shape} not broadcastable to ({M}, {N})"
    )
    bias_block = (tm if bm == M else bm, tn if bn == N else bn)

    def bias_map(i, j, k):
        return (i if bm == M else 0, j if bn == N else 0)

    grid = (M // tm, N // tn, K // tk)
    single_k = grid[2] == 1

    def _isz(x):
        return jnp.dtype(x.dtype).itemsize

    cost = pl.CostEstimate(
        flops=2 * M * N * K,
        transcendentals=0,
        bytes_accessed=(
            M * K * _isz(m1)
            + K * N * _isz(m2)
            + bm * bn * _isz(bias2d)
            + M * N * jnp.dtype(out_dtype).itemsize
        ),
    )

    # Double-buffered tile footprint (+ f32 accumulator on the general path);
    # only raise the scoped VMEM limit if the 32 MiB default would not cover it
    # (cap at 64 MiB so it stays valid on v7x).
    footprint = (
        2 * (tm * tk * _isz(m1) + tk * tn * _isz(m2))
        + 2 * bias_block[0] * bias_block[1] * _isz(bias2d)
        + 2 * tm * tn * jnp.dtype(out_dtype).itemsize
        + (0 if single_k else tm * tn * 4)
    )
    vmem_limit = None
    if footprint > 30 * 1024 * 1024:
        vmem_limit = min(int(footprint * 3 // 2), 64 * 1024 * 1024)

    kernel = _addmm_kernel_single_k if single_k else _addmm_kernel_acc
    scratch_shapes = [] if single_k else [pltpu.VMEM((tm, tn), jnp.float32)]

    return pl.pallas_call(
        kernel,
        out_shape=jax.ShapeDtypeStruct((M, N), out_dtype),
        grid_spec=pltpu.PrefetchScalarGridSpec(
            num_scalar_prefetch=0,
            grid=grid,
            in_specs=[
                pl.BlockSpec(bias_block, bias_map),                # bias (broadcast)
                pl.BlockSpec((tm, tk), lambda i, j, k: (i, k)),    # m1 tile
                pl.BlockSpec((tk, tn), lambda i, j, k: (k, j)),    # m2 tile
            ],
            out_specs=pl.BlockSpec((tm, tn), lambda i, j, k: (i, j)),
            scratch_shapes=scratch_shapes,
        ),
        compiler_params=pltpu.CompilerParams(
            dimension_semantics=("parallel", "parallel", "arbitrary"),
            vmem_limit_bytes=vmem_limit,
        ),
        cost_estimate=cost,
    )(bias2d, m1, m2)


def _rel_err(a, b):
    a = a.astype(jnp.float32)
    b = b.astype(jnp.float32)
    return jnp.linalg.norm(a - b) / (jnp.linalg.norm(b) + 1e-9)


if __name__ == "__main__":
    key = jax.random.PRNGKey(0)
    k1, k2, k3, k4 = jax.random.split(key, 4)

    # Small shapes consistent with addmm: m1 (M,K), m2 (K,N), input broadcastable to (M,N)
    M, K, N = 256, 384, 512
    m1 = jax.random.normal(k2, (M, K), dtype=jnp.float32)
    m2 = jax.random.normal(k3, (K, N), dtype=jnp.float32)

    # Case 1: full (M, N) bias (matches the test-module call pattern).
    # Smaller max tiles so the 3-D grid / K-accumulation path is exercised.
    bias_full = jax.random.normal(k1, (M, N), dtype=jnp.float32)
    out = jax.block_until_ready(
        addmm(bias_full, m1, m2, max_tm=128, max_tn=256, max_tk=128)
    )
    ref = bias_full + m1 @ m2
    assert out.shape == (M, N)
    assert float(_rel_err(out, ref)) < 1e-2

    # Case 2: (N,)-shaped bias -> broadcast inside the kernel, default (large)
    # tiles -> exercises the single-K fast path (no scratch accumulator).
    bias_row = jax.random.normal(k4, (N,), dtype=jnp.float32)
    out2 = jax.block_until_ready(addmm(bias_row, m1, m2))
    ref2 = bias_row[None, :] + m1 @ m2
    assert out2.shape == (M, N)
    assert float(_rel_err(out2, ref2)) < 1e-2

    print("KERNEL_OK")
</pallas_src>

<mosaic_0001>
module attributes {stable_mosaic.version = 11 : i64} {
  func.func @_addmm_kernel_acc(%arg0: i32, %arg1: i32, %arg2: i32, %arg3: memref<128x256xf32, #tpu.memory_space<vmem>>, %arg4: memref<128x128xf32, #tpu.memory_space<vmem>>, %arg5: memref<128x256xf32, #tpu.memory_space<vmem>>, %arg6: memref<128x256xf32, #tpu.memory_space<vmem>>, %arg7: memref<128x256xf32, #tpu.memory_space<vmem>>) attributes {dimension_semantics = [#tpu.dimension_semantics<parallel>, #tpu.dimension_semantics<parallel>, #tpu.dimension_semantics<arbitrary>], iteration_bounds = array<i64: 2, 2, 3>, scalar_prefetch = 0 : i64, scratch_operands = 1 : i64, tpu.core_type = #tpu.core_type<tc>, window_params = [{transform_indices = @transform_0, window_bounds = array<i64: 128, 256>}, {transform_indices = @transform_1, window_bounds = array<i64: 128, 128>}, {transform_indices = @transform_2, window_bounds = array<i64: 128, 256>}, {transform_indices = @transform_3, window_bounds = array<i64: 128, 256>}]} {
    %c0_i32 = arith.constant 0 : i32
    %0 = arith.cmpi eq, %arg2, %c0_i32 : i32
    %1 = arith.extui %0 : i1 to i32
    %c0_i32_0 = arith.constant 0 : i32
    %2 = arith.cmpi ne, %1, %c0_i32_0 : i32
    scf.if %2 {
      %cst_9 = arith.constant 0.000000e+00 : f32
      %12 = vector.broadcast %cst_9 : f32 to vector<128x256xf32>
      %c0_10 = arith.constant 0 : index
      %c0_11 = arith.constant 0 : index
      %13 = vector.load %arg7[%c0_10, %c0_11] : memref<128x256xf32, #tpu.memory_space<vmem>>, vector<128x256xf32>
      tpu.vector_store %arg7[%c0_10, %c0_11], %12 {strides = array<i32>} : memref<128x256xf32, #tpu.memory_space<vmem>>, vector<128x256xf32>,
    } else {
    }
    %c0 = arith.constant 0 : index
    %c0_1 = arith.constant 0 : index
    %3 = vector.load %arg7[%c0, %c0_1] : memref<128x256xf32, #tpu.memory_space<vmem>>, vector<128x256xf32>
    %c0_2 = arith.constant 0 : index
    %c0_3 = arith.constant 0 : index
    %4 = vector.load %arg4[%c0_2, %c0_3] : memref<128x128xf32, #tpu.memory_space<vmem>>, vector<128x128xf32>
    %c0_4 = arith.constant 0 : index
    %c0_5 = arith.constant 0 : index
    %5 = vector.load %arg5[%c0_4, %c0_5] : memref<128x256xf32, #tpu.memory_space<vmem>>, vector<128x256xf32>
    %cst = arith.constant dense<0.000000e+00> : vector<128x256xf32>
    %6 = tpu.matmul %4, %5, %cst {dimension_numbers = #tpu.dot_dimension_numbers<[1], [0], [0], [1], [0, 0, 1, 1], [], []>} : vector<128x128xf32>, vector<128x256xf32>, vector<128x256xf32> -> vector<128x256xf32>
    %7 = arith.addf %3, %6 : vector<128x256xf32>
    %c0_6 = arith.constant 0 : index
    %c0_7 = arith.constant 0 : index
    %8 = vector.load %arg7[%c0_6, %c0_7] : memref<128x256xf32, #tpu.memory_space<vmem>>, vector<128x256xf32>
    tpu.vector_store %arg7[%c0_6, %c0_7], %7 {strides = array<i32>} : memref<128x256xf32, #tpu.memory_space<vmem>>, vector<128x256xf32>,
    %c2_i32 = arith.constant 2 : i32
    %9 = arith.cmpi eq, %arg2, %c2_i32 : i32
    %10 = arith.extui %9 : i1 to i32
    %c0_i32_8 = arith.constant 0 : i32
    %11 = arith.cmpi ne, %10, %c0_i32_8 : i32
    scf.if %11 {
      %c0_9 = arith.constant 0 : index
      %c0_10 = arith.constant 0 : index
      %12 = vector.load %arg7[%c0_9, %c0_10] : memref<128x256xf32, #tpu.memory_space<vmem>>, vector<128x256xf32>
      %c0_11 = arith.constant 0 : index
      %c0_12 = arith.constant 0 : index
      %13 = vector.load %arg3[%c0_11, %c0_12] : memref<128x256xf32, #tpu.memory_space<vmem>>, vector<128x256xf32>
      %14 = arith.addf %12, %13 : vector<128x256xf32>
      %c0_13 = arith.constant 0 : index
      %c0_14 = arith.constant 0 : index
      %15 = vector.load %arg6[%c0_13, %c0_14] : memref<128x256xf32, #tpu.memory_space<vmem>>, vector<128x256xf32>
      tpu.vector_store %arg6[%c0_13, %c0_14], %14 {strides = array<i32>} : memref<128x256xf32, #tpu.memory_space<vmem>>, vector<128x256xf32>,
    } else {
    }
    return
  }
  func.func @transform_0(%arg0: i32, %arg1: i32, %arg2: i32) -> (i32, i32) {
    %c0_i32 = arith.constant 0 : i32
    return %arg0, %arg1 : i32, i32
  }
  func.func @transform_1(%arg0: i32, %arg1: i32, %arg2: i32) -> (i32, i32) {
    %c0_i32 = arith.constant 0 : i32
    return %arg0, %arg2 : i32, i32
  }
  func.func @transform_2(%arg0: i32, %arg1: i32, %arg2: i32) -> (i32, i32) {
    %c0_i32 = arith.constant 0 : i32
    return %arg2, %arg1 : i32, i32
  }
  func.func @transform_3(%arg0: i32, %arg1: i32, %arg2: i32) -> (i32, i32) {
    %c0_i32 = arith.constant 0 : i32
    return %arg0, %arg1 : i32, i32
  }
}

</mosaic_0001>

<llo_original>
// kernel: tpu_custom_call.1
$region0: #{tpu_custom_call.1}
  #allocation0 [shape = 'u32[]', space=smem, size = 0x4, offset = 0x4, fixed_abs, tag = 'smem constant byte address 0x4 - core index']
  #allocation1 [shape = 'u32[144,128]{1,0:T(1,128)}', space=vmem, size = 0x12000, scoped, tag = 'internal scratch']
  #allocation2 [shape = 'f32[128,256]{1,0:T(8,128)}', space=vmem, size = 0x20000, scoped, tag = 'scratch operand']
  %s0 = inlined_call_operand.hbm [shape: f32[256,512], index: 0, kind: input, shape index: {}]
  %s1 = inlined_call_operand.hbm [shape: f32[256,384], index: 1, kind: input, shape index: {}]
  %s2 = inlined_call_operand.hbm [shape: f32[384,512], index: 2, kind: input, shape index: {}]
  %s3 = inlined_call_operand.hbm [shape: f32[256,512], index: 3, kind: output, shape index: {}]
  %s4 = sld [smem:[#allocation0]]
  $region65: #{tpu_custom_call.1} parent=0
    _
  %s6 = ssub.s32 1, %s4
  %s7 = scalar_select 0, %s6, %s4
  $region1: #{tpu_custom_call.1} parent=0
    #allocation3 [shape = 'u8[262144]{0}', space=vmem, size = 0x40000, scoped, tag = 'input window, operand 0']
    #allocation4 [shape = 's32[2]{0}', space=sflag, size = 0x8, scoped, tag = 'scoped memory for tpu_custom_call.1']
    #allocation5 [shape = 's32[2]{0}', space=sflag, size = 0x8, scoped, tag = 'scoped memory for tpu_custom_call.1']
    #allocation6 [shape = 'u8[131072]{0}', space=vmem, size = 0x20000, scoped, tag = 'input window, operand 1']
    #allocation7 [shape = 's32[2]{0}', space=sflag, size = 0x8, scoped, tag = 'scoped memory for tpu_custom_call.1']
    #allocation8 [shape = 'u8[262144]{0}', space=vmem, size = 0x40000, scoped, tag = 'input window, operand 2']
    #allocation9 [shape = 'u8[262144]{0}', space=vmem, size = 0x40000, scoped, tag = 'output window, operand 0']
    %8 = vsyncpa [#allocation4], 0
    %s9 = scalar_lea.sflag [#allocation4], 1
    %10 = vsyncpa %s9, 0
    %11 = vsyncpa [#allocation7], 0
    %s12 = scalar_lea.sflag [#allocation7], 1
    %13 = vsyncpa %s12, 0
    %14 = vsyncpa [#allocation5], 0
    %s15 = scalar_lea.sflag [#allocation5], 1
    %16 = vsyncpa %s15, 0
    loop: start=0, step=1, limit=14
    $region2: #{tpu_custom_call.1} parent=1 // loop_pre_header
      _
    $region3: #{tpu_custom_call.1} parent=1 // loop_header
      %s18 = sphi 0, %s22
      %p19 = scmp.ge.s32.totalorder %s18, 14
      %s25 = sphi 0, %s44
      %s26 = sphi 0, %s40
      %s27 = sphi 0, %s36
      %s28 = sphi 0, %s25
      %s29 = sphi 0, %s26
      %s30 = sphi 0, %s27
      %s31 = sphi 0, %s28
      %s32 = sphi 0, %s29
      %s33 = sphi 0, %s30
      %s49 = sphi 0, %s51
      %s52 = sphi 0, %s49
      %s53 = sphi 0, %s52
      %s69 = sphi 0, %s53
      %s77 = sphi 0, %s79
      %s80 = sphi 0, %s77
      %s81 = sphi 0, %s80
      %s97 = sphi 0, %s81
      %s105 = sphi 0, %s107
      %s108 = sphi 0, %s105
      %s109 = sphi 0, %s108
      %s125 = sphi 0, %s109
      %s133 = sphi 0, %s135
      %s136 = sphi 0, %s133
      %s137 = sphi 0, %s136
      %s153 = sphi 0, %s137
    $region4: #{tpu_custom_call.1} parent=1 // loop_header_branch
      %21 = sbr.rel (%p19) target = $region8
    $region5: #{tpu_custom_call.1} parent=1 // loop_body
      %s23 = ssub.s32 %s18, 1
      %s24 = ssub.s32 %s18, 2
      %s34 = sadd.s32 1, %s27
      %p35 = scmp.ge.s32.totalorder %s34, 3
      %s36 = scalar_select %p35, 0, %s34
      %s37 = sadd.s32 1, %s26
      %s38 = scalar_select %p35, %s37, %s26
      %p39 = scmp.ge.s32.totalorder %s38, 2
      %s40 = scalar_select %p39, 0, %s38
      %s41 = sadd.s32 1, %s25
      %s42 = scalar_select %p39, %s41, %s25
      %p43 = scmp.ge.s32.totalorder %s42, 2
      %s44 = scalar_select %p43, 0, %s42
      %s45 = ssub.s32 %s25, %s44
      %s46 = ssub.s32 %s26, %s40
      %s47 = sor.u32 %s45, %s46
      %p48 = scmp.eq.s32.totalorder %s47, 0
      %s50 = sadd.s32 %s49, 1
      %s51 = scalar_select %p48, %s49, %s50
      %p54 = pneg %p48
      %p55 = scmp.eq.s32.totalorder %s18, 11
      %p56 = por %p54, %p55
      %p57 = scmp.ne.s32.totalorder %s49, %s52
      %p58 = scmp.eq.s32.totalorder %s18, 0
      %p59 = por %p57, %p58
      %p60 = scmp.ne.s32.totalorder %s49, %s52
      %p61 = scmp.eq.s32.totalorder %s23, 11
      %p62 = por %p60, %p61
      %p63 = scmp.ne.s32.totalorder %s52, %s53
      %p64 = scmp.eq.s32.totalorder %s23, 0
      %p65 = por %p63, %p64
      %p66 = scmp.ne.s32.totalorder %s52, %s53
      %p67 = scmp.eq.s32.totalorder %s24, 11
      %p68 = por %p66, %p67
      %p70 = scmp.ne.s32.totalorder %s53, %s69
      %p71 = scmp.eq.s32.totalorder %s24, 0
      %p72 = por %p70, %p71
      %s73 = ssub.s32 %s25, %s44
      %s74 = ssub.s32 %s27, %s36
      %s75 = sor.u32 %s73, %s74
      %p76 = scmp.eq.s32.totalorder %s75, 0
      %s78 = sadd.s32 %s77, 1
      %s79 = scalar_select %p76, %s77, %s78
      %p82 = pneg %p76
      %p83 = scmp.eq.s32.totalorder %s18, 11
      %p84 = por %p82, %p83
      %p85 = scmp.ne.s32.totalorder %s77, %s80
      %p86 = scmp.eq.s32.totalorder %s18, 0
      %p87 = por %p85, %p86
      %p88 = scmp.ne.s32.totalorder %s77, %s80
      %p89 = scmp.eq.s32.totalorder %s23, 11
      %p90 = por %p88, %p89
      %p91 = scmp.ne.s32.totalorder %s80, %s81
      %p92 = scmp.eq.s32.totalorder %s23, 0
      %p93 = por %p91, %p92
      %p94 = scmp.ne.s32.totalorder %s80, %s81
      %p95 = scmp.eq.s32.totalorder %s24, 11
      %p96 = por %p94, %p95
      %p98 = scmp.ne.s32.totalorder %s81, %s97
      %p99 = scmp.eq.s32.totalorder %s24, 0
      %p100 = por %p98, %p99
      %s101 = ssub.s32 %s27, %s36
      %s102 = ssub.s32 %s26, %s40
      %s103 = sor.u32 %s101, %s102
      %p104 = scmp.eq.s32.totalorder %s103, 0
      %s106 = sadd.s32 %s105, 1
      %s107 = scalar_select %p104, %s105, %s106
      %p110 = pneg %p104
      %p111 = scmp.eq.s32.totalorder %s18, 11
      %p112 = por %p110, %p111
      %p113 = scmp.ne.s32.totalorder %s105, %s108
      %p114 = scmp.eq.s32.totalorder %s18, 0
      %p115 = por %p113, %p114
      %p116 = scmp.ne.s32.totalorder %s105, %s108
      %p117 = scmp.eq.s32.totalorder %s23, 11
      %p118 = por %p116, %p117
      %p119 = scmp.ne.s32.totalorder %s108, %s109
      %p120 = scmp.eq.s32.totalorder %s23, 0
      %p121 = por %p119, %p120
      %p122 = scmp.ne.s32.totalorder %s108, %s109
      %p123 = scmp.eq.s32.totalorder %s24, 11
      %p124 = por %p122, %p123
      %p126 = scmp.ne.s32.totalorder %s109, %s125
      %p127 = scmp.eq.s32.totalorder %s24, 0
      %p128 = por %p126, %p127
      %s129 = ssub.s32 %s25, %s44
      %s130 = ssub.s32 %s26, %s40
      %s131 = sor.u32 %s129, %s130
      %p132 = scmp.eq.s32.totalorder %s131, 0
      %s134 = sadd.s32 %s133, 1
      %s135 = scalar_select %p132, %s133, %s134
      %p138 = pneg %p132
      %p139 = scmp.eq.s32.totalorder %s18, 11
      %p140 = por %p138, %p139
      %p141 = scmp.ne.s32.totalorder %s133, %s136
      %p142 = scmp.eq.s32.totalorder %s18, 0
      %p143 = por %p141, %p142
      %p144 = scmp.ne.s32.totalorder %s133, %s136
      %p145 = scmp.eq.s32.totalorder %s23, 11
      %p146 = por %p144, %p145
      %p147 = scmp.ne.s32.totalorder %s136, %s137
      %p148 = scmp.eq.s32.totalorder %s23, 0
      %p149 = por %p147, %p148
      %p150 = scmp.ne.s32.totalorder %s136, %s137
      %p151 = scmp.eq.s32.totalorder %s24, 11
      %p152 = por %p150, %p151
      %p154 = scmp.ne.s32.totalorder %s137, %s153
      %p155 = scmp.eq.s32.totalorder %s24, 0
      %p156 = por %p154, %p155
      %p157 = scmp.le.s32.totalorder 1, %s18
      %p158 = scmp.lt.s32.totalorder %s18, 13
      %p159 = pnand %p157, %p158
      %p160 = pneg %p159
      // Predicated region
      $region9: #{tpu_custom_call.1} parent=5 // pred_check
        _
      $region10: #{tpu_custom_call.1} parent=5 // pred_check_branch
        %162 = sbr.rel (%p159) target = $region12
      $region11: #{tpu_custom_call.1} parent=5 // pred_region
        %s163 = ssub.s32 %s18, 1
      $region12: #{tpu_custom_call.1} parent=5 // pred_fallthru
        _
      %p164 = scmp.lt.s32.totalorder %s18, 12
      // Predicated region
      $region13: #{tpu_custom_call.1} parent=5 // pred_check
        %p165 = pneg %p164
      $region14: #{tpu_custom_call.1} parent=5 // pred_check_branch
        %167 = sbr.rel (%p165) target = $region16
      $region15: #{tpu_custom_call.1} parent=5 // pred_region
        // Predicated region
        $region17: #{tpu_custom_call.1} parent=15 // pred_check
          %p168 = pneg %p59
        $region18: #{tpu_custom_call.1} parent=15 // pred_check_branch
          %170 = sbr.rel (%p168) target = $region20
        $region19: #{tpu_custom_call.1} parent=15 // pred_region
          %s171 = sand.u32 %s49, 1
          %s172 = scalar_lea.sflag [#allocation4], %s171
          %s173 = sand.u32 %s49, 1
          %s174 = smul.addr %s173, 256
          %s175 = scalar_lea.vmem [#allocation3], %s174
          %s176 = smul.u32 16, %s25
          %s177 = smul.u32 2, %s26
          %s179 = ssub.s32 4096, 4096
          %180 = vsyncadd %s172, %s179
          %s181 = smul.addr %s176, 4
          %s182 = sadd.s32 %s177, %s181
          %s183 = smul.addr %s182, 128
          %s184 = scalar_lea.hbm %s0, %s183
          %s185 = sshll.u32 %s175, 4
          %s186 = int_to_ptr.vmem [resolvable:$true] %s185
          %191 = dma.hbm_to_vmem [thread:$0]  %s184, 4096, %s186, %s172, 512, 256, 16
        $region20: #{tpu_custom_call.1} parent=15 // pred_fallthru
          _
        // Predicated region
        $region21: #{tpu_custom_call.1} parent=15 // pred_check
          %p192 = pneg %p87
        $region22: #{tpu_custom_call.1} parent=15 // pred_check_branch
          %194 = sbr.rel (%p192) target = $region24
        $region23: #{tpu_custom_call.1} parent=15 // pred_region
          %s195 = sand.u32 %s18, 1
          %s196 = scalar_lea.sflag [#allocation7], %s195
          %s197 = sand.u32 %s77, 1
          %s198 = smul.addr %s197, 128
          %s199 = scalar_lea.vmem [#allocation6], %s198
          %s200 = smul.u32 16, %s25
          %s202 = ssub.s32 2048, 2048
          %203 = vsyncadd %s196, %s202
          %s204 = smul.addr %s200, 3
          %s205 = sadd.s32 %s27, %s204
          %s206 = smul.addr %s205, 128
          %s207 = scalar_lea.hbm %s1, %s206
          %s208 = sshll.u32 %s199, 4
          %s209 = int_to_ptr.vmem [resolvable:$true] %s208
          %214 = dma.hbm_to_vmem [thread:$0]  %s207, 2048, %s209, %s196, 384, 128, 8
        $region24: #{tpu_custom_call.1} parent=15 // pred_fallthru
          _
        // Predicated region
        $region25: #{tpu_custom_call.1} parent=15 // pred_check
          %p215 = pneg %p115
        $region26: #{tpu_custom_call.1} parent=15 // pred_check_branch
          %217 = sbr.rel (%p215) target = $region28
        $region27: #{tpu_custom_call.1} parent=15 // pred_region
          %s218 = sand.u32 %s18, 1
          %s219 = scalar_lea.sflag [#allocation7], %s218
          %s220 = sand.u32 %s105, 1
          %s221 = smul.addr %s220, 256
          %s222 = scalar_lea.vmem [#allocation8], %s221
          %s223 = smul.u32 16, %s27
          %s224 = smul.u32 2, %s26
          %s226 = ssub.s32 4096, 4096
          %227 = vsyncadd %s219, %s226
          %s228 = smul.addr %s223, 4
          %s229 = sadd.s32 %s224, %s228
          %s230 = smul.addr %s229, 128
          %s231 = scalar_lea.hbm %s2, %s230
          %s232 = sshll.u32 %s222, 4
          %s233 = int_to_ptr.vmem [resolvable:$true] %s232
          %238 = dma.hbm_to_vmem [thread:$0]  %s231, 4096, %s233, %s219, 512, 256, 16
        $region28: #{tpu_custom_call.1} parent=15 // pred_fallthru
          _
      $region16: #{tpu_custom_call.1} parent=5 // pred_fallthru
        _
      %p239 = scmp.le.s32.totalorder 1, %s18
      %p240 = scmp.lt.s32.totalorder %s18, 13
      %p241 = pnand %p239, %p240
      %p242 = pneg %p241
      // Predicated region
      $region29: #{tpu_custom_call.1} parent=5 // pred_check
        _
      $region30: #{tpu_custom_call.1} parent=5 // pred_check_branch
        %244 = sbr.rel (%p241) target = $region32
      $region31: #{tpu_custom_call.1} parent=5 // pred_region
        %s245 = ssub.s32 %s18, 1
        %s246 = sand.u32 %s52, 1
        %s247 = scalar_lea.sflag [#allocation4], %s246
        %s248 = sand.u32 %s52, 1
        %s249 = smul.addr %s248, 256
        %s250 = scalar_lea.vmem [#allocation3], %s249
        // Predicated region
        $region33: #{tpu_custom_call.1} parent=31 // pred_check
          %p251 = pneg %p65
        $region34: #{tpu_custom_call.1} parent=31 // pred_check_branch
          %253 = sbr.rel (%p251) target = $region36
        $region35: #{tpu_custom_call.1} parent=31 // pred_region
          %254 = dma.done %s247, 4096
        $region36: #{tpu_custom_call.1} parent=31 // pred_fallthru
          _
        %s255 = sand.u32 %s23, 1
        %s256 = scalar_lea.sflag [#allocation7], %s255
        %s257 = sand.u32 %s80, 1
        %s258 = smul.addr %s257, 128
        %s259 = scalar_lea.vmem [#allocation6], %s258
        // Predicated region
        $region37: #{tpu_custom_call.1} parent=31 // pred_check
          %p260 = pneg %p93
        $region38: #{tpu_custom_call.1} parent=31 // pred_check_branch
          %262 = sbr.rel (%p260) target = $region40
        $region39: #{tpu_custom_call.1} parent=31 // pred_region
          %263 = dma.done %s256, 2048
        $region40: #{tpu_custom_call.1} parent=31 // pred_fallthru
          _
        %s264 = sand.u32 %s23, 1
        %s265 = scalar_lea.sflag [#allocation7], %s264
        %s266 = sand.u32 %s108, 1
        %s267 = smul.addr %s266, 256
        %s268 = scalar_lea.vmem [#allocation8], %s267
        // Predicated region
        $region41: #{tpu_custom_call.1} parent=31 // pred_check
          %p269 = pneg %p121
        $region42: #{tpu_custom_call.1} parent=31 // pred_check_branch
          %271 = sbr.rel (%p269) target = $region44
        $region43: #{tpu_custom_call.1} parent=31 // pred_region
          %272 = dma.done %s265, 4096
        $region44: #{tpu_custom_call.1} parent=31 // pred_fallthru
          _
        %s273 = sand.u32 %s52, 1
        %s274 = scalar_lea.sflag [#allocation4], %s273
        %s275 = sand.u32 %s52, 1
        %s276 = smul.addr %s275, 256
        %s277 = scalar_lea.vmem [#allocation3], %s276
        %p278 = pneg %p65
        %p279 = pneg %p62
        %s280 = sand.u32 %s23, 1
        %s281 = scalar_lea.sflag [#allocation7], %s280
        %s282 = sand.u32 %s80, 1
        %s283 = smul.addr %s282, 128
        %s284 = scalar_lea.vmem [#allocation6], %s283
        %p285 = pneg %p93
        %p286 = pneg %p90
        %s287 = sand.u32 %s23, 1
        %s288 = scalar_lea.sflag [#allocation7], %s287
        %s289 = sand.u32 %s108, 1
        %s290 = smul.addr %s289, 256
        %s291 = scalar_lea.vmem [#allocation8], %s290
        %p292 = pneg %p121
        %p293 = pneg %p118
        %p294 = pneg %p149
        %p295 = pneg %p146
        %s296 = sand.u32 %s136, 1
        %s297 = scalar_lea.sflag [#allocation5], %s296
        %s298 = sand.u32 %s136, 1
        %s299 = smul.addr %s298, 256
        %s300 = scalar_lea.vmem [#allocation9], %s299
        %s301 = smul.u32 16, %s28
        %s302 = smul.u32 2, %s29
        %s303 = smul.u32 16, %s28
        %s304 = smul.u32 16, %s30
        %s305 = smul.u32 2, %s29
        %s306 = smul.u32 16, %s28
        %s307 = smul.u32 2, %s29
        %p308 = scmp.eq.s32.totalorder %s30, 0
        // Predicated region
        $region45: #{tpu_custom_call.1} parent=31 // pred_check
          %p309 = pneg %p308
        $region46: #{tpu_custom_call.1} parent=31 // pred_check_branch
          %311 = sbr.rel (%p309) target = $region48
        $region47: #{tpu_custom_call.1} parent=31 // pred_region
          %312 = vst [vmem:[#allocation2] sm:$0xff] 0.0
          %313 = vst [vmem:[#allocation2 + $0x8] sm:$0xff] 0.0
          %314 = vst [vmem:[#allocation2 + $0x10] sm:$0xff] 0.0
          %315 = vst [vmem:[#allocation2 + $0x18] sm:$0xff] 0.0
          %316 = vst [vmem:[#allocation2 + $0x20] sm:$0xff] 0.0
          %317 = vst [vmem:[#allocation2 + $0x28] sm:$0xff] 0.0
          %318 = vst [vmem:[#allocation2 + $0x30] sm:$0xff] 0.0
          %319 = vst [vmem:[#allocation2 + $0x38] sm:$0xff] 0.0
          %320 = vst [vmem:[#allocation2 + $0x40] sm:$0xff] 0.0
          %321 = vst [vmem:[#allocation2 + $0x48] sm:$0xff] 0.0
          %322 = vst [vmem:[#allocation2 + $0x50] sm:$0xff] 0.0
          %323 = vst [vmem:[#allocation2 + $0x58] sm:$0xff] 0.0
          %324 = vst [vmem:[#allocation2 + $0x60] sm:$0xff] 0.0
          %325 = vst [vmem:[#allocation2 + $0x68] sm:$0xff] 0.0
          %326 = vst [vmem:[#allocation2 + $0x70] sm:$0xff] 0.0
          %327 = vst [vmem:[#allocation2 + $0x78] sm:$0xff] 0.0
          %328 = vst [vmem:[#allocation2 + $0x80] sm:$0xff] 0.0
          %329 = vst [vmem:[#allocation2 + $0x88] sm:$0xff] 0.0
          %330 = vst [vmem:[#allocation2 + $0x90] sm:$0xff] 0.0
          %331 = vst [vmem:[#allocation2 + $0x98] sm:$0xff] 0.0
          %332 = vst [vmem:[#allocation2 + $0xa0] sm:$0xff] 0.0
          %333 = vst [vmem:[#allocation2 + $0xa8] sm:$0xff] 0.0
          %334 = vst [vmem:[#allocation2 + $0xb0] sm:$0xff] 0.0
          %335 = vst [vmem:[#allocation2 + $0xb8] sm:$0xff] 0.0
          %336 = vst [vmem:[#allocation2 + $0xc0] sm:$0xff] 0.0
          %337 = vst [vmem:[#allocation2 + $0xc8] sm:$0xff] 0.0
          %338 = vst [vmem:[#allocation2 + $0xd0] sm:$0xff] 0.0
          %339 = vst [vmem:[#allocation2 + $0xd8] sm:$0xff] 0.0
          %340 = vst [vmem:[#allocation2 + $0xe0] sm:$0xff] 0.0
          %341 = vst [vmem:[#allocation2 + $0xe8] sm:$0xff] 0.0
          %342 = vst [vmem:[#allocation2 + $0xf0] sm:$0xff] 0.0
          %343 = vst [vmem:[#allocation2 + $0xf8] sm:$0xff] 0.0
        $region48: #{tpu_custom_call.1} parent=31 // pred_fallthru
          _
        %v344 = vld [vmem:[#allocation2] sm:$0xff]
        %v345 = vld [vmem:[#allocation2 + $0x8] sm:$0xff]
        %v346 = vld [vmem:[#allocation2 + $0x10] sm:$0xff]
        %v347 = vld [vmem:[#allocation2 + $0x18] sm:$0xff]
        %v348 = vld [vmem:[#allocation2 + $0x20] sm:$0xff]
        %v349 = vld [vmem:[#allocation2 + $0x28] sm:$0xff]
        %v350 = vld [vmem:[#allocation2 + $0x30] sm:$0xff]
        %v351 = vld [vmem:[#allocation2 + $0x38] sm:$0xff]
        %v352 = vld [vmem:[#allocation2 + $0x40] sm:$0xff]
        %v353 = vld [vmem:[#allocation2 + $0x48] sm:$0xff]
        %v354 = vld [vmem:[#allocation2 + $0x50] sm:$0xff]
        %v355 = vld [vmem:[#allocation2 + $0x58] sm:$0xff]
        %v356 = vld [vmem:[#allocation2 + $0x60] sm:$0xff]
        %v357 = vld [vmem:[#allocation2 + $0x68] sm:$0xff]
        %v358 = vld [vmem:[#allocation2 + $0x70] sm:$0xff]
        %v359 = vld [vmem:[#allocation2 + $0x78] sm:$0xff]
        %v360 = vld [vmem:[#allocation2 + $0x80] sm:$0xff]
        %v361 = vld [vmem:[#allocation2 + $0x88] sm:$0xff]
        %v362 = vld [vmem:[#allocation2 + $0x90] sm:$0xff]
        %v363 = vld [vmem:[#allocation2 + $0x98] sm:$0xff]
        %v364 = vld [vmem:[#allocation2 + $0xa0] sm:$0xff]
        %v365 = vld [vmem:[#allocation2 + $0xa8] sm:$0xff]
        %v366 = vld [vmem:[#allocation2 + $0xb0] sm:$0xff]
        %v367 = vld [vmem:[#allocation2 + $0xb8] sm:$0xff]
        %v368 = vld [vmem:[#allocation2 + $0xc0] sm:$0xff]
        %v369 = vld [vmem:[#allocation2 + $0xc8] sm:$0xff]
        %v370 = vld [vmem:[#allocation2 + $0xd0] sm:$0xff]
        %v371 = vld [vmem:[#allocation2 + $0xd8] sm:$0xff]
        %v372 = vld [vmem:[#allocation2 + $0xe0] sm:$0xff]
        %v373 = vld [vmem:[#allocation2 + $0xe8] sm:$0xff]
        %v374 = vld [vmem:[#allocation2 + $0xf0] sm:$0xff]
        %v375 = vld [vmem:[#allocation2 + $0xf8] sm:$0xff]
        %v376 = vld [vmem:[%s259] sm:$0xff]
        %v377 = vld [vmem:[%s259 + $0x8] sm:$0xff]
        %v378 = vld [vmem:[%s259 + $0x10] sm:$0xff]
        %v379 = vld [vmem:[%s259 + $0x18] sm:$0xff]
        %v380 = vld [vmem:[%s259 + $0x20] sm:$0xff]
        %v381 = vld [vmem:[%s259 + $0x28] sm:$0xff]
        %v382 = vld [vmem:[%s259 + $0x30] sm:$0xff]
        %v383 = vld [vmem:[%s259 + $0x38] sm:$0xff]
        %v384 = vld [vmem:[%s259 + $0x40] sm:$0xff]
        %v385 = vld [vmem:[%s259 + $0x48] sm:$0xff]
        %v386 = vld [vmem:[%s259 + $0x50] sm:$0xff]
        %v387 = vld [vmem:[%s259 + $0x58] sm:$0xff]
        %v388 = vld [vmem:[%s259 + $0x60] sm:$0xff]
        %v389 = vld [vmem:[%s259 + $0x68] sm:$0xff]
        %v390 = vld [vmem:[%s259 + $0x70] sm:$0xff]
        %v391 = vld [vmem:[%s259 + $0x78] sm:$0xff]
        %v392 = vld [vmem:[%s268] sm:$0xff]
        %v393 = vld [vmem:[%s268 + $0x8] sm:$0xff]
        %v394 = vld [vmem:[%s268 + $0x10] sm:$0xff]
        %v395 = vld [vmem:[%s268 + $0x18] sm:$0xff]
        %v396 = vld [vmem:[%s268 + $0x20] sm:$0xff]
        %v397 = vld [vmem:[%s268 + $0x28] sm:$0xff]
        %v398 = vld [vmem:[%s268 + $0x30] sm:$0xff]
        %v399 = vld [vmem:[%s268 + $0x38] sm:$0xff]
        %v400 = vld [vmem:[%s268 + $0x40] sm:$0xff]
        %v401 = vld [vmem:[%s268 + $0x48] sm:$0xff]
        %v402 = vld [vmem:[%s268 + $0x50] sm:$0xff]
        %v403 = vld [vmem:[%s268 + $0x58] sm:$0xff]
        %v404 = vld [vmem:[%s268 + $0x60] sm:$0xff]
        %v405 = vld [vmem:[%s268 + $0x68] sm:$0xff]
        %v406 = vld [vmem:[%s268 + $0x70] sm:$0xff]
        %v407 = vld [vmem:[%s268 + $0x78] sm:$0xff]
        %v408 = vld [vmem:[%s268 + $0x80] sm:$0xff]
        %v409 = vld [vmem:[%s268 + $0x88] sm:$0xff]
        %v410 = vld [vmem:[%s268 + $0x90] sm:$0xff]
        %v411 = vld [vmem:[%s268 + $0x98] sm:$0xff]
        %v412 = vld [vmem:[%s268 + $0xa0] sm:$0xff]
        %v413 = vld [vmem:[%s268 + $0xa8] sm:$0xff]
        %v414 = vld [vmem:[%s268 + $0xb0] sm:$0xff]
        %v415 = vld [vmem:[%s268 + $0xb8] sm:$0xff]
        %v416 = vld [vmem:[%s268 + $0xc0] sm:$0xff]
        %v417 = vld [vmem:[%s268 + $0xc8] sm:$0xff]
        %v418 = vld [vmem:[%s268 + $0xd0] sm:$0xff]
        %v419 = vld [vmem:[%s268 + $0xd8] sm:$0xff]
        %v420 = vld [vmem:[%s268 + $0xe0] sm:$0xff]
        %v421 = vld [vmem:[%s268 + $0xe8] sm:$0xff]
        %v422 = vld [vmem:[%s268 + $0xf0] sm:$0xff]
        %v423 = vld [vmem:[%s268 + $0xf8] sm:$0xff]
        %424 = vmatprep.subr.mxu0 %v423
        %425 = vmatpush1.msra.mxu0 %v422
        %426 = vmatprep.subr.mxu0 %v421
        %427 = vmatpush1.msra.mxu0 %v420
        %428 = vmatprep.subr.mxu0 %v419
        %429 = vmatpush1.msra.mxu0 %v418
        %430 = vmatprep.subr.mxu0 %v417
        %431 = vmatpush1.msra.mxu0 %v416
        %432 = vmatprep.subr.mxu0 %v415
        %433 = vmatpush1.msra.mxu0 %v414
        %434 = vmatprep.subr.mxu0 %v413
        %435 = vmatpush1.msra.mxu0 %v412
        %436 = vmatprep.subr.mxu0 %v411
        %437 = vmatpush1.msra.mxu0 %v410
        %438 = vmatprep.subr.mxu0 %v409
        %439 = vmatpush1.msra.mxu0 %v408
        %440 = vmatprep.subr.mxu0 %v407
        %441 = vmatpush1.msra.mxu0 %v406
        %442 = vmatprep.subr.mxu0 %v405
        %443 = vmatpush1.msra.mxu0 %v404
        %444 = vmatprep.subr.mxu0 %v403
        %445 = vmatpush1.msra.mxu0 %v402
        %446 = vmatprep.subr.mxu0 %v401
        %447 = vmatpush1.msra.mxu0 %v400
        %448 = vmatprep.subr.mxu0 %v399
        %449 = vmatpush1.msra.mxu0 %v398
        %450 = vmatprep.subr.mxu0 %v397
        %451 = vmatpush1.msra.mxu0 %v396
        %452 = vmatprep.subr.mxu0 %v395
        %453 = vmatpush1.msra.mxu0 %v394
        %454 = vmatprep.subr.mxu0 %v393
        %455 = vmatpush1.msra.mxu0 %v392
        %456 = vmatprep.subr.mxu0 0.0
        %457 = vmatpush2.msra.mxu0 0.0
        %458 = vmatprep.subr.mxu0 0.0
        %459 = vmatpush2.msra.mxu0 0.0
        %460 = vmatprep.subr.mxu0 0.0
        %461 = vmatpush2.msra.mxu0 0.0
        %462 = vmatprep.subr.mxu0 0.0
        %463 = vmatpush2.msra.mxu0 0.0
        %464 = vmatprep.subr.mxu0 0.0
        %465 = vmatpush2.msra.mxu0 0.0
        %466 = vmatprep.subr.mxu0 0.0
        %467 = vmatpush2.msra.mxu0 0.0
        %468 = vmatprep.subr.mxu0 0.0
        %469 = vmatpush2.msra.mxu0 0.0
        %470 = vmatprep.subr.mxu0 0.0
        %471 = vmatpush2.msra.mxu0 0.0
        %472 = vmatprep.subr.mxu0 0.0
        %473 = vmatpush2.msra.mxu0 0.0
        %474 = vmatprep.subr.mxu0 0.0
        %475 = vmatpush2.msra.mxu0 0.0
        %476 = vmatprep.subr.mxu0 0.0
        %477 = vmatpush2.msra.mxu0 0.0
        %478 = vmatprep.subr.mxu0 0.0
        %479 = vmatpush2.msra.mxu0 0.0
        %480 = vmatprep.subr.mxu0 0.0
        %481 = vmatpush2.msra.mxu0 0.0
        %482 = vmatprep.subr.mxu0 0.0
        %483 = vmatpush2.msra.mxu0 0.0
        %484 = vmatprep.subr.mxu0 0.0
        %485 = vmatpush2.msra.mxu0 0.0
        %486 = vmatprep.subr.mxu0 0.0
        %487 = vmatpush2.msra.mxu0 0.0
        %488 = vmatprep.mubr.f32.mxu0 0.0
        %489 = vmatmul.mubr.f32.gmra.mxu0 %v376
        %v490 = vpop.f32.mrf.mxu0
        %v491 = vadd.f32 0.0, %v490
        %v492 = vpop.f32.mrf.mxu0
        %v493 = vadd.f32 0.0, %v492
        %494 = vmatprep.mubr.f32.mxu0 0.0
        %495 = vmatmul.mubr.f32.gmra.mxu0 %v377
        %v496 = vpop.f32.mrf.mxu0
        %v497 = vadd.f32 0.0, %v496
        %v498 = vpop.f32.mrf.mxu0
        %v499 = vadd.f32 0.0, %v498
        %500 = vmatprep.mubr.f32.mxu0 0.0
        %501 = vmatmul.mubr.f32.gmra.mxu0 %v378
        %v502 = vpop.f32.mrf.mxu0
        %v503 = vadd.f32 0.0, %v502
        %v504 = vpop.f32.mrf.mxu0
        %v505 = vadd.f32 0.0, %v504
        %506 = vmatprep.mubr.f32.mxu0 0.0
        %507 = vmatmul.mubr.f32.gmra.mxu0 %v379
        %v508 = vpop.f32.mrf.mxu0
        %v509 = vadd.f32 0.0, %v508
        %v510 = vpop.f32.mrf.mxu0
        %v511 = vadd.f32 0.0, %v510
        %512 = vmatprep.mubr.f32.mxu0 0.0
        %513 = vmatmul.mubr.f32.gmra.mxu0 %v380
        %v514 = vpop.f32.mrf.mxu0
        %v515 = vadd.f32 0.0, %v514
        %v516 = vpop.f32.mrf.mxu0
        %v517 = vadd.f32 0.0, %v516
        %518 = vmatprep.mubr.f32.mxu0 0.0
        %519 = vmatmul.mubr.f32.gmra.mxu0 %v381
        %v520 = vpop.f32.mrf.mxu0
        %v521 = vadd.f32 0.0, %v520
        %v522 = vpop.f32.mrf.mxu0
        %v523 = vadd.f32 0.0, %v522
        %524 = vmatprep.mubr.f32.mxu0 0.0
        %525 = vmatmul.mubr.f32.gmra.mxu0 %v382
        %v526 = vpop.f32.mrf.mxu0
        %v527 = vadd.f32 0.0, %v526
        %v528 = vpop.f32.mrf.mxu0
        %v529 = vadd.f32 0.0, %v528
        %530 = vmatprep.mubr.f32.mxu0 0.0
        %531 = vmatmul.mubr.f32.gmra.mxu0 %v383
        %v532 = vpop.f32.mrf.mxu0
        %v533 = vadd.f32 0.0, %v532
        %v534 = vpop.f32.mrf.mxu0
        %v535 = vadd.f32 0.0, %v534
        %536 = vmatprep.mubr.f32.mxu0 0.0
        %537 = vmatmul.mubr.f32.gmra.mxu0 %v384
        %v538 = vpop.f32.mrf.mxu0
        %v539 = vadd.f32 0.0, %v538
        %v540 = vpop.f32.mrf.mxu0
        %v541 = vadd.f32 0.0, %v540
        %542 = vmatprep.mubr.f32.mxu0 0.0
        %543 = vmatmul.mubr.f32.gmra.mxu0 %v385
        %v544 = vpop.f32.mrf.mxu0
        %v545 = vadd.f32 0.0, %v544
        %v546 = vpop.f32.mrf.mxu0
        %v547 = vadd.f32 0.0, %v546
        %548 = vmatprep.mubr.f32.mxu0 0.0
        %549 = vmatmul.mubr.f32.gmra.mxu0 %v386
        %v550 = vpop.f32.mrf.mxu0
        %v551 = vadd.f32 0.0, %v550
        %v552 = vpop.f32.mrf.mxu0
        %v553 = vadd.f32 0.0, %v552
        %554 = vmatprep.mubr.f32.mxu0 0.0
        %555 = vmatmul.mubr.f32.gmra.mxu0 %v387
        %v556 = vpop.f32.mrf.mxu0
        %v557 = vadd.f32 0.0, %v556
        %v558 = vpop.f32.mrf.mxu0
        %v559 = vadd.f32 0.0, %v558
        %560 = vmatprep.mubr.f32.mxu0 0.0
        %561 = vmatmul.mubr.f32.gmra.mxu0 %v388
        %v562 = vpop.f32.mrf.mxu0
        %v563 = vadd.f32 0.0, %v562
        %v564 = vpop.f32.mrf.mxu0
        %v565 = vadd.f32 0.0, %v564
        %566 = vmatprep.mubr.f32.mxu0 0.0
        %567 = vmatmul.mubr.f32.gmra.mxu0 %v389
        %v568 = vpop.f32.mrf.mxu0
        %v569 = vadd.f32 0.0, %v568
        %v570 = vpop.f32.mrf.mxu0
        %v571 = vadd.f32 0.0, %v570
        %572 = vmatprep.mubr.f32.mxu0 0.0
        %573 = vmatmul.mubr.f32.gmra.mxu0 %v390
        %v574 = vpop.f32.mrf.mxu0
        %v575 = vadd.f32 0.0, %v574
        %v576 = vpop.f32.mrf.mxu0
        %v577 = vadd.f32 0.0, %v576
        %578 = vmatprep.mubr.f32.mxu0 0.0
        %579 = vmatmul.mubr.f32.gmra.mxu0 %v391
        %v580 = vpop.f32.mrf.mxu0
        %v581 = vadd.f32 0.0, %v580
        %v582 = vpop.f32.mrf.mxu0
        %v583 = vadd.f32 0.0, %v582
        %584 = vdwg.mxu0
        %v585 = vadd.f32 %v344, %v491
        %v586 = vadd.f32 %v345, %v493
        %v587 = vadd.f32 %v346, %v497
        %v588 = vadd.f32 %v347, %v499
        %v589 = vadd.f32 %v348, %v503
        %v590 = vadd.f32 %v349, %v505
        %v591 = vadd.f32 %v350, %v509
        %v592 = vadd.f32 %v351, %v511
        %v593 = vadd.f32 %v352, %v515
        %v594 = vadd.f32 %v353, %v517
        %v595 = vadd.f32 %v354, %v521
        %v596 = vadd.f32 %v355, %v523
        %v597 = vadd.f32 %v356, %v527
        %v598 = vadd.f32 %v357, %v529
        %v599 = vadd.f32 %v358, %v533
        %v600 = vadd.f32 %v359, %v535
        %v601 = vadd.f32 %v360, %v539
        %v602 = vadd.f32 %v361, %v541
        %v603 = vadd.f32 %v362, %v545
        %v604 = vadd.f32 %v363, %v547
        %v605 = vadd.f32 %v364, %v551
        %v606 = vadd.f32 %v365, %v553
        %v607 = vadd.f32 %v366, %v557
        %v608 = vadd.f32 %v367, %v559
        %v609 = vadd.f32 %v368, %v563
        %v610 = vadd.f32 %v369, %v565
        %v611 = vadd.f32 %v370, %v569
        %v612 = vadd.f32 %v371, %v571
        %v613 = vadd.f32 %v372, %v575
        %v614 = vadd.f32 %v373, %v577
        %v615 = vadd.f32 %v374, %v581
        %v616 = vadd.f32 %v375, %v583
        %617 = vst [vmem:[#allocation2] sm:$0xff] %v585
        %618 = vst [vmem:[#allocation2 + $0x8] sm:$0xff] %v586
        %619 = vst [vmem:[#allocation2 + $0x10] sm:$0xff] %v587
        %620 = vst [vmem:[#allocation2 + $0x18] sm:$0xff] %v588
        %621 = vst [vmem:[#allocation2 + $0x20] sm:$0xff] %v589
        %622 = vst [vmem:[#allocation2 + $0x28] sm:$0xff] %v590
        %623 = vst [vmem:[#allocation2 + $0x30] sm:$0xff] %v591
        %624 = vst [vmem:[#allocation2 + $0x38] sm:$0xff] %v592
        %625 = vst [vmem:[#allocation2 + $0x40] sm:$0xff] %v593
        %626 = vst [vmem:[#allocation2 + $0x48] sm:$0xff] %v594
        %627 = vst [vmem:[#allocation2 + $0x50] sm:$0xff] %v595
        %628 = vst [vmem:[#allocation2 + $0x58] sm:$0xff] %v596
        %629 = vst [vmem:[#allocation2 + $0x60] sm:$0xff] %v597
        %630 = vst [vmem:[#allocation2 + $0x68] sm:$0xff] %v598
        %631 = vst [vmem:[#allocation2 + $0x70] sm:$0xff] %v599
        %632 = vst [vmem:[#allocation2 + $0x78] sm:$0xff] %v600
        %633 = vst [vmem:[#allocation2 + $0x80] sm:$0xff] %v601
        %634 = vst [vmem:[#allocation2 + $0x88] sm:$0xff] %v602
        %635 = vst [vmem:[#allocation2 + $0x90] sm:$0xff] %v603
        %636 = vst [vmem:[#allocation2 + $0x98] sm:$0xff] %v604
        %637 = vst [vmem:[#allocation2 + $0xa0] sm:$0xff] %v605
        %638 = vst [vmem:[#allocation2 + $0xa8] sm:$0xff] %v606
        %639 = vst [vmem:[#allocation2 + $0xb0] sm:$0xff] %v607
        %640 = vst [vmem:[#allocation2 + $0xb8] sm:$0xff] %v608
        %641 = vst [vmem:[#allocation2 + $0xc0] sm:$0xff] %v609
        %642 = vst [vmem:[#allocation2 + $0xc8] sm:$0xff] %v610
        %643 = vst [vmem:[#allocation2 + $0xd0] sm:$0xff] %v611
        %644 = vst [vmem:[#allocation2 + $0xd8] sm:$0xff] %v612
        %645 = vst [vmem:[#allocation2 + $0xe0] sm:$0xff] %v613
        %646 = vst [vmem:[#allocation2 + $0xe8] sm:$0xff] %v614
        %647 = vst [vmem:[#allocation2 + $0xf0] sm:$0xff] %v615
        %648 = vst [vmem:[#allocation2 + $0xf8] sm:$0xff] %v616
        %p649 = scmp.eq.s32.totalorder %s30, 2
        // Predicated region
        $region49: #{tpu_custom_call.1} parent=31 // pred_check
          %p650 = pneg %p649
        $region50: #{tpu_custom_call.1} parent=31 // pred_check_branch
          %652 = sbr.rel (%p650) target = $region52
        $region51: #{tpu_custom_call.1} parent=31 // pred_region
          %v653 = vld [vmem:[#allocation2] sm:$0xff]
          %v654 = vld [vmem:[#allocation2 + $0x8] sm:$0xff]
          %v655 = vld [vmem:[#allocation2 + $0x10] sm:$0xff]
          %v656 = vld [vmem:[#allocation2 + $0x18] sm:$0xff]
          %v657 = vld [vmem:[#allocation2 + $0x20] sm:$0xff]
          %v658 = vld [vmem:[#allocation2 + $0x28] sm:$0xff]
          %v659 = vld [vmem:[#allocation2 + $0x30] sm:$0xff]
          %v660 = vld [vmem:[#allocation2 + $0x38] sm:$0xff]
          %v661 = vld [vmem:[#allocation2 + $0x40] sm:$0xff]
          %v662 = vld [vmem:[#allocation2 + $0x48] sm:$0xff]
          %v663 = vld [vmem:[#allocation2 + $0x50] sm:$0xff]
          %v664 = vld [vmem:[#allocation2 + $0x58] sm:$0xff]
          %v665 = vld [vmem:[#allocation2 + $0x60] sm:$0xff]
          %v666 = vld [vmem:[#allocation2 + $0x68] sm:$0xff]
          %v667 = vld [vmem:[#allocation2 + $0x70] sm:$0xff]
          %v668 = vld [vmem:[#allocation2 + $0x78] sm:$0xff]
          %v669 = vld [vmem:[#allocation2 + $0x80] sm:$0xff]
          %v670 = vld [vmem:[#allocation2 + $0x88] sm:$0xff]
          %v671 = vld [vmem:[#allocation2 + $0x90] sm:$0xff]
          %v672 = vld [vmem:[#allocation2 + $0x98] sm:$0xff]
          %v673 = vld [vmem:[#allocation2 + $0xa0] sm:$0xff]
          %v674 = vld [vmem:[#allocation2 + $0xa8] sm:$0xff]
          %v675 = vld [vmem:[#allocation2 + $0xb0] sm:$0xff]
          %v676 = vld [vmem:[#allocation2 + $0xb8] sm:$0xff]
          %v677 = vld [vmem:[#allocation2 + $0xc0] sm:$0xff]
          %v678 = vld [vmem:[#allocation2 + $0xc8] sm:$0xff]
          %v679 = vld [vmem:[#allocation2 + $0xd0] sm:$0xff]
          %v680 = vld [vmem:[#allocation2 + $0xd8] sm:$0xff]
          %v681 = vld [vmem:[#allocation2 + $0xe0] sm:$0xff]
          %v682 = vld [vmem:[#allocation2 + $0xe8] sm:$0xff]
          %v683 = vld [vmem:[#allocation2 + $0xf0] sm:$0xff]
          %v684 = vld [vmem:[#allocation2 + $0xf8] sm:$0xff]
          %v685 = vld [vmem:[%s250] sm:$0xff]
          %v686 = vld [vmem:[%s250 + $0x8] sm:$0xff]
          %v687 = vld [vmem:[%s250 + $0x10] sm:$0xff]
          %v688 = vld [vmem:[%s250 + $0x18] sm:$0xff]
          %v689 = vld [vmem:[%s250 + $0x20] sm:$0xff]
          %v690 = vld [vmem:[%s250 + $0x28] sm:$0xff]
          %v691 = vld [vmem:[%s250 + $0x30] sm:$0xff]
          %v692 = vld [vmem:[%s250 + $0x38] sm:$0xff]
          %v693 = vld [vmem:[%s250 + $0x40] sm:$0xff]
          %v694 = vld [vmem:[%s250 + $0x48] sm:$0xff]
          %v695 = vld [vmem:[%s250 + $0x50] sm:$0xff]
          %v696 = vld [vmem:[%s250 + $0x58] sm:$0xff]
          %v697 = vld [vmem:[%s250 + $0x60] sm:$0xff]
          %v698 = vld [vmem:[%s250 + $0x68] sm:$0xff]
          %v699 = vld [vmem:[%s250 + $0x70] sm:$0xff]
          %v700 = vld [vmem:[%s250 + $0x78] sm:$0xff]
          %v701 = vld [vmem:[%s250 + $0x80] sm:$0xff]
          %v702 = vld [vmem:[%s250 + $0x88] sm:$0xff]
          %v703 = vld [vmem:[%s250 + $0x90] sm:$0xff]
          %v704 = vld [vmem:[%s250 + $0x98] sm:$0xff]
          %v705 = vld [vmem:[%s250 + $0xa0] sm:$0xff]
          %v706 = vld [vmem:[%s250 + $0xa8] sm:$0xff]
          %v707 = vld [vmem:[%s250 + $0xb0] sm:$0xff]
          %v708 = vld [vmem:[%s250 + $0xb8] sm:$0xff]
          %v709 = vld [vmem:[%s250 + $0xc0] sm:$0xff]
          %v710 = vld [vmem:[%s250 + $0xc8] sm:$0xff]
          %v711 = vld [vmem:[%s250 + $0xd0] sm:$0xff]
          %v712 = vld [vmem:[%s250 + $0xd8] sm:$0xff]
          %v713 = vld [vmem:[%s250 + $0xe0] sm:$0xff]
          %v714 = vld [vmem:[%s250 + $0xe8] sm:$0xff]
          %v715 = vld [vmem:[%s250 + $0xf0] sm:$0xff]
          %v716 = vld [vmem:[%s250 + $0xf8] sm:$0xff]
          %v717 = vadd.f32 %v653, %v685
          %v718 = vadd.f32 %v654, %v686
          %v719 = vadd.f32 %v655, %v687
          %v720 = vadd.f32 %v656, %v688
          %v721 = vadd.f32 %v657, %v689
          %v722 = vadd.f32 %v658, %v690
          %v723 = vadd.f32 %v659, %v691
          %v724 = vadd.f32 %v660, %v692
          %v725 = vadd.f32 %v661, %v693
          %v726 = vadd.f32 %v662, %v694
          %v727 = vadd.f32 %v663, %v695
          %v728 = vadd.f32 %v664, %v696
          %v729 = vadd.f32 %v665, %v697
          %v730 = vadd.f32 %v666, %v698
          %v731 = vadd.f32 %v667, %v699
          %v732 = vadd.f32 %v668, %v700
          %v733 = vadd.f32 %v669, %v701
          %v734 = vadd.f32 %v670, %v702
          %v735 = vadd.f32 %v671, %v703
          %v736 = vadd.f32 %v672, %v704
          %v737 = vadd.f32 %v673, %v705
          %v738 = vadd.f32 %v674, %v706
          %v739 = vadd.f32 %v675, %v707
          %v740 = vadd.f32 %v676, %v708
          %v741 = vadd.f32 %v677, %v709
          %v742 = vadd.f32 %v678, %v710
          %v743 = vadd.f32 %v679, %v711
          %v744 = vadd.f32 %v680, %v712
          %v745 = vadd.f32 %v681, %v713
          %v746 = vadd.f32 %v682, %v714
          %v747 = vadd.f32 %v683, %v715
          %v748 = vadd.f32 %v684, %v716
          %749 = vst [vmem:[%s300] sm:$0xff] %v717
          %750 = vst [vmem:[%s300 + $0x8] sm:$0xff] %v718
          %751 = vst [vmem:[%s300 + $0x10] sm:$0xff] %v719
          %752 = vst [vmem:[%s300 + $0x18] sm:$0xff] %v720
          %753 = vst [vmem:[%s300 + $0x20] sm:$0xff] %v721
          %754 = vst [vmem:[%s300 + $0x28] sm:$0xff] %v722
          %755 = vst [vmem:[%s300 + $0x30] sm:$0xff] %v723
          %756 = vst [vmem:[%s300 + $0x38] sm:$0xff] %v724
          %757 = vst [vmem:[%s300 + $0x40] sm:$0xff] %v725
          %758 = vst [vmem:[%s300 + $0x48] sm:$0xff] %v726
          %759 = vst [vmem:[%s300 + $0x50] sm:$0xff] %v727
          %760 = vst [vmem:[%s300 + $0x58] sm:$0xff] %v728
          %761 = vst [vmem:[%s300 + $0x60] sm:$0xff] %v729
          %762 = vst [vmem:[%s300 + $0x68] sm:$0xff] %v730
          %763 = vst [vmem:[%s300 + $0x70] sm:$0xff] %v731
          %764 = vst [vmem:[%s300 + $0x78] sm:$0xff] %v732
          %765 = vst [vmem:[%s300 + $0x80] sm:$0xff] %v733
          %766 = vst [vmem:[%s300 + $0x88] sm:$0xff] %v734
          %767 = vst [vmem:[%s300 + $0x90] sm:$0xff] %v735
          %768 = vst [vmem:[%s300 + $0x98] sm:$0xff] %v736
          %769 = vst [vmem:[%s300 + $0xa0] sm:$0xff] %v737
          %770 = vst [vmem:[%s300 + $0xa8] sm:$0xff] %v738
          %771 = vst [vmem:[%s300 + $0xb0] sm:$0xff] %v739
          %772 = vst [vmem:[%s300 + $0xb8] sm:$0xff] %v740
          %773 = vst [vmem:[%s300 + $0xc0] sm:$0xff] %v741
          %774 = vst [vmem:[%s300 + $0xc8] sm:$0xff] %v742
          %775 = vst [vmem:[%s300 + $0xd0] sm:$0xff] %v743
          %776 = vst [vmem:[%s300 + $0xd8] sm:$0xff] %v744
          %777 = vst [vmem:[%s300 + $0xe0] sm:$0xff] %v745
          %778 = vst [vmem:[%s300 + $0xe8] sm:$0xff] %v746
          %779 = vst [vmem:[%s300 + $0xf0] sm:$0xff] %v747
          %780 = vst [vmem:[%s300 + $0xf8] sm:$0xff] %v748
        $region52: #{tpu_custom_call.1} parent=31 // pred_fallthru
          _
        %s781 = sand.u32 %s136, 1
        %s782 = scalar_lea.sflag [#allocation5], %s781
        %s783 = sand.u32 %s136, 1
        %s784 = smul.addr %s783, 256
        %s785 = scalar_lea.vmem [#allocation9], %s784
        // Predicated region
        $region53: #{tpu_custom_call.1} parent=31 // pred_check
          %p786 = pneg %p146
        $region54: #{tpu_custom_call.1} parent=31 // pred_check_branch
          %788 = sbr.rel (%p786) target = $region56
        $region55: #{tpu_custom_call.1} parent=31 // pred_region
          %s789 = smul.u32 16, %s28
          %s790 = smul.u32 2, %s29
          %s792 = ssub.s32 4096, 4096
          %793 = vsyncadd %s782, %s792
          %s794 = smul.addr %s789, 4
          %s795 = sadd.s32 %s790, %s794
          %s796 = smul.addr %s795, 128
          %s797 = scalar_lea.hbm %s3, %s796
          %s798 = sshll.u32 %s785, 4
          %s799 = int_to_ptr.vmem [resolvable:$true] %s798
          %804 = dma.vmem_to_hbm [thread:$0]  %s799, 4096, %s797, %s782, 256, 512, 16
        $region56: #{tpu_custom_call.1} parent=31 // pred_fallthru
          _
      $region32: #{tpu_custom_call.1} parent=5 // pred_fallthru
        _
      %p805 = scmp.le.s32.totalorder 2, %s18
      // Predicated region
      $region57: #{tpu_custom_call.1} parent=5 // pred_check
        %p806 = pneg %p805
      $region58: #{tpu_custom_call.1} parent=5 // pred_check_branch
        %808 = sbr.rel (%p806) target = $region60
      $region59: #{tpu_custom_call.1} parent=5 // pred_region
        %s809 = ssub.s32 %s18, 2
        // Predicated region
        $region61: #{tpu_custom_call.1} parent=59 // pred_check
          %p810 = pneg %p152
        $region62: #{tpu_custom_call.1} parent=59 // pred_check_branch
          %812 = sbr.rel (%p810) target = $region64
        $region63: #{tpu_custom_call.1} parent=59 // pred_region
          %s813 = sand.u32 %s137, 1
          %s814 = scalar_lea.sflag [#allocation5], %s813
          %s815 = sand.u32 %s137, 1
          %s816 = smul.addr %s815, 256
          %s817 = scalar_lea.vmem [#allocation9], %s816
          %818 = dma.done %s814, 4096
        $region64: #{tpu_custom_call.1} parent=59 // pred_fallthru
          _
      $region60: #{tpu_custom_call.1} parent=5 // pred_fallthru
        _
    $region6: #{tpu_custom_call.1} parent=1 // loop_footer
      %s22 = sadd.s32 1, %s18
    $region7: #{tpu_custom_call.1} parent=1 // loop_footer_branch
      %17 = sbr.rel target = $region3
    $region8: #{tpu_custom_call.1} parent=1 // loop_exit
      _
    %819 = vsyncpa [#allocation4], 1
    %s820 = scalar_lea.sflag [#allocation4], 1
    %821 = vsyncpa %s820, 1
    %822 = vsyncpa [#allocation7], 1
    %s823 = scalar_lea.sflag [#allocation7], 1
    %824 = vsyncpa %s823, 1
    %825 = vsyncpa [#allocation5], 1
    %s826 = scalar_lea.sflag [#allocation5], 1
    %827 = vsyncpa %s826, 1

</llo_original>
